<compile_context>
chip_gen: v7x
topology: tpu7x:2x2x1
jax: 0.10.0
libtpu: 0.0.40
codegen_flags: <defaults>
</compile_context>

<pallas_src>
import functools

import jax
import jax.numpy as jnp
from jax.experimental import pallas as pl
from jax.experimental.pallas import tpu as pltpu


# --------------------------------------------------------------------------------------
# Pallas kernel: fully fused GCN forward for ONE view (all layers in-kernel).
#   refs = (a_ref, x_ref, w1_ref, b1_ref, w2_ref, b2_ref, ..., o_ref)
# layer_cfg[i] = (aggregate_first, apply_relu)
# --------------------------------------------------------------------------------------
def _fused_gcn_kernel(a_ref, x_ref, *refs, layer_cfg):
    o_ref = refs[-1]
    wb_refs = refs[:-1]

    a = a_ref[...]                       # (N, N)   normalized adjacency for this view
    h = x_ref[...]                       # (N, Din) node features for this view

    for li, (aggregate_first, apply_relu) in enumerate(layer_cfg):
        w = wb_refs[2 * li][...]         # (Din_i, Dout_i)
        b = wb_refs[2 * li + 1][...]     # (1, Dout_i)
        if aggregate_first:
            # (A @ H) @ W : cheaper when Din_i <= Dout_i (N^2 contraction over Din_i)
            h = jnp.dot(
                jnp.dot(a, h, preferred_element_type=jnp.float32),
                w, preferred_element_type=jnp.float32)
        else:
            # A @ (H @ W) : cheaper when Dout_i < Din_i (N^2 contraction over Dout_i)
            h = jnp.dot(
                a, jnp.dot(h, w, preferred_element_type=jnp.float32),
                preferred_element_type=jnp.float32)
        h = h + b                        # (1, Dout_i) broadcast on the lane axis
        if apply_relu:
            h = jnp.maximum(h, 0.0)

    o_ref[...] = h.astype(o_ref.dtype)


def fused_gcn_forward(a_norm, x, weights, biases):
    """One pallas_call computing the full multi-layer GCN for V stacked views.

    a_norm : (V, N, N) float32  dense normalized adjacency per view
    x      : (V, N, Din) float32 node features per view
    weights: list of (Din_i, Dout_i) float32
    biases : list of (Dout_i,) float32
    returns: (V, N, Dout_last) float32
    """
    v_views, n, d_in0 = x.shape
    n_layers = len(weights)

    # Per-layer matmul-order + activation flags (static, baked into the kernel).
    layer_cfg = []
    d_in = d_in0
    for li, w in enumerate(weights):
        d_out = w.shape[1]
        aggregate_first = d_in <= d_out          # run the NxN contraction over min(d_in,d_out)
        apply_relu = li < n_layers - 1
        layer_cfg.append((aggregate_first, apply_relu))
        d_in = d_out
    d_final = weights[-1].shape[1]

    # BlockSpecs: view axis is a Squeezed (None) leading block dim driven by the grid;
    # weights/biases are full blocks reused by every grid step.
    in_specs = [
        pl.BlockSpec((None, n, n), lambda vi: (vi, 0, 0)),        # A_norm  (view vi)
        pl.BlockSpec((None, n, d_in0), lambda vi: (vi, 0, 0)),    # X       (view vi)
    ]
    args = [a_norm, x]
    for w, b in zip(weights, biases):
        in_specs.append(pl.BlockSpec(w.shape, lambda vi: (0, 0)))
        in_specs.append(pl.BlockSpec((1, b.shape[0]), lambda vi: (0, 0)))
        args.append(w)
        args.append(b.reshape(1, -1))

    kernel = functools.partial(_fused_gcn_kernel, layer_cfg=tuple(layer_cfg))
    return pl.pallas_call(
        kernel,
        out_shape=jax.ShapeDtypeStruct((v_views, n, d_final), jnp.float32),
        grid=(v_views,),
        in_specs=in_specs,
        out_specs=pl.BlockSpec((None, n, d_final), lambda vi: (vi, 0, 0)),
        compiler_params=pltpu.CompilerParams(
            # View axis is independent -> shards across TensorCores on v7x (2 TC/chip).
            dimension_semantics=("parallel",),
        ),
    )(*args)


# --------------------------------------------------------------------------------------
# Plain-JAX glue: dense normalized adjacency (GCNConv gcn_norm with self loops).
# Duplicate edges accumulate (scatter-add), self loops only added where missing
# (matches torch_geometric add_remaining_self_loops).
# --------------------------------------------------------------------------------------
def normalized_adjacency(edge_index, num_nodes):
    src = edge_index[0]
    dst = edge_index[1]
    a = jnp.zeros((num_nodes, num_nodes), jnp.float32)
    a = a.at[dst, src].add(1.0)                               # message flows src -> dst
    diag = jnp.diagonal(a)
    a = a + jnp.diag(jnp.where(diag > 0.0, 0.0, 1.0))         # add_remaining_self_loops
    deg = a.sum(axis=1)
    d_inv_sqrt = jnp.where(deg > 0, jax.lax.rsqrt(deg), 0.0)
    return d_inv_sqrt[:, None] * a * d_inv_sqrt[None, :]


# --------------------------------------------------------------------------------------
# Model: GCN backbone applied to two graph views (Model.forward)
# --------------------------------------------------------------------------------------
def init_params(key, in_dim, hid_dim, out_dim, n_layers):
    """Glorot-ish init for GCNConv layers (+ fc1/fc2 exist in Model.__init__ but are
    NOT used by Model.forward — kept only for structural fidelity)."""
    dims = [in_dim] + [hid_dim] * (n_layers - 1) + [out_dim]
    params = {"convs": []}
    keys = jax.random.split(key, n_layers + 2)
    for li in range(n_layers):
        d_i, d_o = dims[li], dims[li + 1]
        scale = jnp.sqrt(6.0 / (d_i + d_o))
        w = jax.random.uniform(keys[li], (d_i, d_o), jnp.float32, -scale, scale)
        b = jnp.zeros((d_o,), jnp.float32)
        params["convs"].append((w, b))
    params["fc1_w"] = jax.random.normal(keys[-2], (out_dim, out_dim * 2), jnp.float32) * 0.02
    params["fc1_b"] = jnp.zeros((out_dim * 2,), jnp.float32)
    params["fc2_w"] = jax.random.normal(keys[-1], (out_dim * 2, out_dim), jnp.float32) * 0.02
    params["fc2_b"] = jnp.zeros((out_dim,), jnp.float32)
    return params


def model_forward(params, x1, edge_index1, x2, edge_index2):
    n = x1.shape[0]
    a1 = normalized_adjacency(edge_index1, n)
    a2 = normalized_adjacency(edge_index2, n)
    a = jnp.stack([a1, a2], axis=0)        # (2, N, N)
    x = jnp.stack([x1, x2], axis=0)        # (2, N, Din)
    weights = [w for (w, _) in params["convs"]]
    biases = [b for (_, b) in params["convs"]]
    out = fused_gcn_forward(a, x, weights, biases)   # single kernel launch for both views
    return out[0], out[1]


# --------------------------------------------------------------------------------------
if __name__ == "__main__":
    key = jax.random.PRNGKey(0)
    N, E = 16, 32
    in_dim, hid_dim, out_dim, n_layers = 8, 32, 16, 2

    k_x1, k_x2, k_e1, k_e2, k_p = jax.random.split(key, 5)
    x1 = jax.random.normal(k_x1, (N, in_dim), jnp.float32)
    x2 = jax.random.normal(k_x2, (N, in_dim), jnp.float32)
    edge_index1 = jax.random.randint(k_e1, (2, E), 0, N, dtype=jnp.int32)
    edge_index2 = jax.random.randint(k_e2, (2, E), 0, N, dtype=jnp.int32)

    params = init_params(k_p, in_dim, hid_dim, out_dim, n_layers)

    u, v = jax.jit(model_forward)(params, x1, edge_index1, x2, edge_index2)
    jax.block_until_ready((u, v))

    # Reference check against plain-JAX dense GCN (same math, no Pallas).
    def ref_backbone(x, ei):
        a = normalized_adjacency(ei, x.shape[0])
        h = x
        for li, (w, b) in enumerate(params["convs"]):
            h = a @ (h @ w) + b[None, :]
            if li < len(params["convs"]) - 1:
                h = jnp.maximum(h, 0.0)
        return h

    u_ref = ref_backbone(x1, edge_index1)
    v_ref = ref_backbone(x2, edge_index2)

    assert u.shape == (N, out_dim) and v.shape == (N, out_dim)
    assert jnp.all(jnp.isfinite(u)) and jnp.all(jnp.isfinite(v))
    assert jnp.allclose(u, u_ref, atol=1e-5, rtol=1e-5)
    assert jnp.allclose(v, v_ref, atol=1e-5, rtol=1e-5)
    print("KERNEL_OK")
</pallas_src>

<mosaic_0001>
module attributes {stable_mosaic.version = 11 : i64} {
  func.func private @main(%arg0: i32) attributes {dimension_semantics = [#tpu.dimension_semantics<core_parallel>], iteration_bounds = array<i64: 2>, tpu.core_type = #tpu.core_type<sc_scalar_subcore>, window_params = []} {
    return
  }
}

module attributes {stable_mosaic.version = 11 : i64} {
  func.func private @main(%arg0: i32) attributes {dimension_semantics = [#tpu.dimension_semantics<core_parallel>], iteration_bounds = array<i64: 2>, tpu.core_type = #tpu.core_type<sc_scalar_subcore>, window_params = []} {
    return
  }
}

module attributes {stable_mosaic.version = 11 : i64} {
  func.func @_fused_gcn_kernel(%arg0: i32, %arg1: memref<1x16x16xf32, #tpu.memory_space<vmem>>, %arg2: memref<1x16x8xf32, #tpu.memory_space<vmem>>, %arg3: memref<8x32xf32, #tpu.memory_space<vmem>>, %arg4: memref<1x32xf32, #tpu.memory_space<vmem>>, %arg5: memref<32x16xf32, #tpu.memory_space<vmem>>, %arg6: memref<1x16xf32, #tpu.memory_space<vmem>>, %arg7: memref<1x16x16xf32, #tpu.memory_space<vmem>>) attributes {dimension_semantics = [#tpu.dimension_semantics<parallel>], iteration_bounds = array<i64: 2>, scalar_prefetch = 0 : i64, scratch_operands = 0 : i64, tpu.core_type = #tpu.core_type<tc>, window_params = [{transform_indices = @transform_0, window_bounds = array<i64: 1, 16, 16>}, {transform_indices = @transform_1, window_bounds = array<i64: 1, 16, 8>}, {pipeline_mode = #tpu.pipeline_mode<synchronous>, transform_indices = @transform_2, window_bounds = array<i64: 8, 32>}, {pipeline_mode = #tpu.pipeline_mode<synchronous>, transform_indices = @transform_3, window_bounds = array<i64: 1, 32>}, {pipeline_mode = #tpu.pipeline_mode<synchronous>, transform_indices = @transform_4, window_bounds = array<i64: 32, 16>}, {pipeline_mode = #tpu.pipeline_mode<synchronous>, transform_indices = @transform_5, window_bounds = array<i64: 1, 16>}, {transform_indices = @transform_6, window_bounds = array<i64: 1, 16, 16>}]} {
    %c0 = arith.constant 0 : index
    %c0_0 = arith.constant 0 : index
    %c0_1 = arith.constant 0 : index
    %0 = vector.load %arg1[%c0, %c0_0, %c0_1] : memref<1x16x16xf32, #tpu.memory_space<vmem>>, vector<1x16x16xf32>
    %1 = vector.shape_cast %0 : vector<1x16x16xf32> to vector<16x16xf32>
    %c0_2 = arith.constant 0 : index
    %c0_3 = arith.constant 0 : index
    %c0_4 = arith.constant 0 : index
    %2 = vector.load %arg2[%c0_2, %c0_3, %c0_4] : memref<1x16x8xf32, #tpu.memory_space<vmem>>, vector<1x16x8xf32>
    %3 = vector.shape_cast %2 : vector<1x16x8xf32> to vector<16x8xf32>
    %c0_5 = arith.constant 0 : index
    %c0_6 = arith.constant 0 : index
    %4 = vector.load %arg3[%c0_5, %c0_6] : memref<8x32xf32, #tpu.memory_space<vmem>>, vector<8x32xf32>
    %c0_7 = arith.constant 0 : index
    %c0_8 = arith.constant 0 : index
    %5 = vector.load %arg4[%c0_7, %c0_8] : memref<1x32xf32, #tpu.memory_space<vmem>>, vector<1x32xf32>
    %cst = arith.constant dense<0.000000e+00> : vector<16x8xf32>
    %6 = tpu.matmul %1, %3, %cst {dimension_numbers = #tpu.dot_dimension_numbers<[1], [0], [0], [1], [0, 0, 1, 1], [], []>} : vector<16x16xf32>, vector<16x8xf32>, vector<16x8xf32> -> vector<16x8xf32>
    %cst_9 = arith.constant dense<0.000000e+00> : vector<16x32xf32>
    %7 = tpu.matmul %6, %4, %cst_9 {dimension_numbers = #tpu.dot_dimension_numbers<[1], [0], [0], [1], [0, 0, 1, 1], [], []>} : vector<16x8xf32>, vector<8x32xf32>, vector<16x32xf32> -> vector<16x32xf32>
    %8 = vector.broadcast %5 : vector<1x32xf32> to vector<16x32xf32>
    %9 = arith.addf %7, %8 : vector<16x32xf32>
    %cst_10 = arith.constant 0.000000e+00 : f32
    %10 = vector.broadcast %cst_10 : f32 to vector<16x32xf32>
    %11 = arith.maximumf %9, %10 : vector<16x32xf32>
    %c0_11 = arith.constant 0 : index
    %c0_12 = arith.constant 0 : index
    %12 = vector.load %arg5[%c0_11, %c0_12] : memref<32x16xf32, #tpu.memory_space<vmem>>, vector<32x16xf32>
    %c0_13 = arith.constant 0 : index
    %c0_14 = arith.constant 0 : index
    %13 = vector.load %arg6[%c0_13, %c0_14] : memref<1x16xf32, #tpu.memory_space<vmem>>, vector<1x16xf32>
    %cst_15 = arith.constant dense<0.000000e+00> : vector<16x16xf32>
    %14 = tpu.matmul %11, %12, %cst_15 {dimension_numbers = #tpu.dot_dimension_numbers<[1], [0], [0], [1], [0, 0, 1, 1], [], []>} : vector<16x32xf32>, vector<32x16xf32>, vector<16x16xf32> -> vector<16x16xf32>
    %cst_16 = arith.constant dense<0.000000e+00> : vector<16x16xf32>
    %15 = tpu.matmul %1, %14, %cst_16 {dimension_numbers = #tpu.dot_dimension_numbers<[1], [0], [0], [1], [0, 0, 1, 1], [], []>} : vector<16x16xf32>, vector<16x16xf32>, vector<16x16xf32> -> vector<16x16xf32>
    %16 = vector.broadcast %13 : vector<1x16xf32> to vector<16x16xf32>
    %17 = arith.addf %15, %16 : vector<16x16xf32>
    %c0_17 = arith.constant 0 : index
    %c0_18 = arith.constant 0 : index
    %c0_19 = arith.constant 0 : index
    %18 = vector.load %arg7[%c0_17, %c0_18, %c0_19] : memref<1x16x16xf32, #tpu.memory_space<vmem>>, vector<1x16x16xf32>
    %19 = vector.shape_cast %18 : vector<1x16x16xf32> to vector<16x16xf32>
    %20 = vector.shape_cast %17 : vector<16x16xf32> to vector<1x16x16xf32>
    tpu.vector_store %arg7[%c0_17, %c0_18, %c0_19], %20 {strides = array<i32>} : memref<1x16x16xf32, #tpu.memory_space<vmem>>, vector<1x16x16xf32>,
    return
  }
  func.func @transform_0(%arg0: i32) -> (i32, i32, i32) {
    %c0_i32 = arith.constant 0 : i32
    %c0_i32_0 = arith.constant 0 : i32
    %c0_i32_1 = arith.constant 0 : i32
    return %arg0, %c0_i32, %c0_i32_0 : i32, i32, i32
  }
  func.func @transform_1(%arg0: i32) -> (i32, i32, i32) {
    %c0_i32 = arith.constant 0 : i32
    %c0_i32_0 = arith.constant 0 : i32
    %c0_i32_1 = arith.constant 0 : i32
    return %arg0, %c0_i32, %c0_i32_0 : i32, i32, i32
  }
  func.func @transform_2(%arg0: i32) -> (i32, i32) {
    %c0_i32 = arith.constant 0 : i32
    %c0_i32_0 = arith.constant 0 : i32
    %c0_i32_1 = arith.constant 0 : i32
    return %c0_i32, %c0_i32_0 : i32, i32
  }
  func.func @transform_3(%arg0: i32) -> (i32, i32) {
    %c0_i32 = arith.constant 0 : i32
    %c0_i32_0 = arith.constant 0 : i32
    %c0_i32_1 = arith.constant 0 : i32
    return %c0_i32, %c0_i32_0 : i32, i32
  }
  func.func @transform_4(%arg0: i32) -> (i32, i32) {
    %c0_i32 = arith.constant 0 : i32
    %c0_i32_0 = arith.constant 0 : i32
    %c0_i32_1 = arith.constant 0 : i32
    return %c0_i32, %c0_i32_0 : i32, i32
  }
  func.func @transform_5(%arg0: i32) -> (i32, i32) {
    %c0_i32 = arith.constant 0 : i32
    %c0_i32_0 = arith.constant 0 : i32
    %c0_i32_1 = arith.constant 0 : i32
    return %c0_i32, %c0_i32_0 : i32, i32
  }
  func.func @transform_6(%arg0: i32) -> (i32, i32, i32) {
    %c0_i32 = arith.constant 0 : i32
    %c0_i32_0 = arith.constant 0 : i32
    %c0_i32_1 = arith.constant 0 : i32
    return %arg0, %c0_i32, %c0_i32_0 : i32, i32, i32
  }
}

</mosaic_0001>

<llo_original>
// kernel: model_forward.1
$region0: #{model_forward.1}
  #allocation0 [shape = 'u32[]', space=smem, size = 0x4, offset = 0x4, fixed_abs, tag = 'smem constant byte address 0x4 - core index']
  #allocation1 [shape = 'u32[144,128]{1,0:T(1,128)}', space=vmem, size = 0x12000, scoped, tag = 'internal scratch']
  %s0 = inlined_call_operand.vmem [shape: f32[2,16,16], index: 0, kind: input, shape index: {}]
  %s1 = inlined_call_operand.vmem [shape: f32[2,16,8], index: 1, kind: input, shape index: {}]
  %s2 = inlined_call_operand.vmem [shape: f32[8,32], index: 2, kind: input, shape index: {}]
  %s3 = inlined_call_operand.vmem [shape: f32[1,32], index: 3, kind: input, shape index: {}]
  %s4 = inlined_call_operand.vmem [shape: f32[32,16], index: 4, kind: input, shape index: {}]
  %s5 = inlined_call_operand.vmem [shape: f32[1,16], index: 5, kind: input, shape index: {}]
  %s6 = inlined_call_operand.vmem [shape: f32[2,16,16], index: 6, kind: output, shape index: {}]
  %s7 = sld [smem:[#allocation0]]
  $region57: #{model_forward.1} parent=0
    _
  %s9 = ssub.s32 1, %s7
  %s10 = scalar_select 0, %s9, %s7
  loop: start=0, step=1, limit=4
  $region2: #{model_forward.1} parent=0 // loop_pre_header
    _
  $region3: #{model_forward.1} parent=0 // loop_header
    %s12 = sphi 0, %s16
    %p13 = scmp.ge.s32.totalorder %s12, 4
    %s22 = sphi 0, %s24
    %s25 = sphi 0, %s22
    %s26 = sphi 0, %s25
    %s42 = sphi 0, %s26
    %s48 = sphi 0, %s50
    %s51 = sphi 0, %s48
    %s52 = sphi 0, %s51
    %s68 = sphi 0, %s52
    %s72 = sphi 0, %s72
    %s74 = sphi 0, %s72
    %s75 = sphi 0, %s74
    %s89 = sphi 0, %s75
    %s93 = sphi 0, %s93
    %s95 = sphi 0, %s93
    %s96 = sphi 0, %s95
    %s110 = sphi 0, %s96
    %s114 = sphi 0, %s114
    %s116 = sphi 0, %s114
    %s117 = sphi 0, %s116
    %s131 = sphi 0, %s117
    %s135 = sphi 0, %s135
    %s137 = sphi 0, %s135
    %s138 = sphi 0, %s137
    %s152 = sphi 0, %s138
    %s158 = sphi 0, %s160
    %s161 = sphi 0, %s158
    %s162 = sphi 0, %s161
    %s178 = sphi 0, %s162
  $region4: #{model_forward.1} parent=0 // loop_header_branch
    %15 = sbr.rel (%p13) target = $region8
  $region5: #{model_forward.1} parent=0 // loop_body
    %s17 = ssub.s32 %s12, 1
    %s18 = ssub.s32 %s12, 2
    %s19 = sadd.s32 %s12, 1
    %s20 = ssub.s32 %s12, %s19
    %p21 = scmp.eq.s32.totalorder %s20, 0
    %s23 = sadd.s32 %s22, 1
    %s24 = scalar_select %p21, %s22, %s23
    %p27 = pneg %p21
    %p28 = scmp.eq.s32.totalorder %s12, 1
    %p29 = por %p27, %p28
    %p30 = scmp.ne.s32.totalorder %s22, %s25
    %p31 = scmp.eq.s32.totalorder %s12, 0
    %p32 = por %p30, %p31
    %p33 = scmp.ne.s32.totalorder %s22, %s25
    %p34 = scmp.eq.s32.totalorder %s17, 1
    %p35 = por %p33, %p34
    %p36 = scmp.ne.s32.totalorder %s25, %s26
    %p37 = scmp.eq.s32.totalorder %s17, 0
    %p38 = por %p36, %p37
    %p39 = scmp.ne.s32.totalorder %s25, %s26
    %p40 = scmp.eq.s32.totalorder %s18, 1
    %p41 = por %p39, %p40
    %p43 = scmp.ne.s32.totalorder %s26, %s42
    %p44 = scmp.eq.s32.totalorder %s18, 0
    %p45 = por %p43, %p44
    %s46 = ssub.s32 %s12, %s19
    %p47 = scmp.eq.s32.totalorder %s46, 0
    %s49 = sadd.s32 %s48, 1
    %s50 = scalar_select %p47, %s48, %s49
    %p53 = pneg %p47
    %p54 = scmp.eq.s32.totalorder %s12, 1
    %p55 = por %p53, %p54
    %p56 = scmp.ne.s32.totalorder %s48, %s51
    %p57 = scmp.eq.s32.totalorder %s12, 0
    %p58 = por %p56, %p57
    %p59 = scmp.ne.s32.totalorder %s48, %s51
    %p60 = scmp.eq.s32.totalorder %s17, 1
    %p61 = por %p59, %p60
    %p62 = scmp.ne.s32.totalorder %s51, %s52
    %p63 = scmp.eq.s32.totalorder %s17, 0
    %p64 = por %p62, %p63
    %p65 = scmp.ne.s32.totalorder %s51, %s52
    %p66 = scmp.eq.s32.totalorder %s18, 1
    %p67 = por %p65, %p66
    %p69 = scmp.ne.s32.totalorder %s52, %s68
    %p70 = scmp.eq.s32.totalorder %s18, 0
    %p71 = por %p69, %p70
    %s73 = sadd.s32 %s72, 1
    %p76 = scmp.eq.s32.totalorder %s12, 1
    %p77 = scmp.ne.s32.totalorder %s72, %s74
    %p78 = scmp.eq.s32.totalorder %s12, 0
    %p79 = por %p77, %p78
    %p80 = scmp.ne.s32.totalorder %s72, %s74
    %p81 = scmp.eq.s32.totalorder %s17, 1
    %p82 = por %p80, %p81
    %p83 = scmp.ne.s32.totalorder %s74, %s75
    %p84 = scmp.eq.s32.totalorder %s17, 0
    %p85 = por %p83, %p84
    %p86 = scmp.ne.s32.totalorder %s74, %s75
    %p87 = scmp.eq.s32.totalorder %s18, 1
    %p88 = por %p86, %p87
    %p90 = scmp.ne.s32.totalorder %s75, %s89
    %p91 = scmp.eq.s32.totalorder %s18, 0
    %p92 = por %p90, %p91
    %s94 = sadd.s32 %s93, 1
    %p97 = scmp.eq.s32.totalorder %s12, 1
    %p98 = scmp.ne.s32.totalorder %s93, %s95
    %p99 = scmp.eq.s32.totalorder %s12, 0
    %p100 = por %p98, %p99
    %p101 = scmp.ne.s32.totalorder %s93, %s95
    %p102 = scmp.eq.s32.totalorder %s17, 1
    %p103 = por %p101, %p102
    %p104 = scmp.ne.s32.totalorder %s95, %s96
    %p105 = scmp.eq.s32.totalorder %s17, 0
    %p106 = por %p104, %p105
    %p107 = scmp.ne.s32.totalorder %s95, %s96
    %p108 = scmp.eq.s32.totalorder %s18, 1
    %p109 = por %p107, %p108
    %p111 = scmp.ne.s32.totalorder %s96, %s110
    %p112 = scmp.eq.s32.totalorder %s18, 0
    %p113 = por %p111, %p112
    %s115 = sadd.s32 %s114, 1
    %p118 = scmp.eq.s32.totalorder %s12, 1
    %p119 = scmp.ne.s32.totalorder %s114, %s116
    %p120 = scmp.eq.s32.totalorder %s12, 0
    %p121 = por %p119, %p120
    %p122 = scmp.ne.s32.totalorder %s114, %s116
    %p123 = scmp.eq.s32.totalorder %s17, 1
    %p124 = por %p122, %p123
    %p125 = scmp.ne.s32.totalorder %s116, %s117
    %p126 = scmp.eq.s32.totalorder %s17, 0
    %p127 = por %p125, %p126
    %p128 = scmp.ne.s32.totalorder %s116, %s117
    %p129 = scmp.eq.s32.totalorder %s18, 1
    %p130 = por %p128, %p129
    %p132 = scmp.ne.s32.totalorder %s117, %s131
    %p133 = scmp.eq.s32.totalorder %s18, 0
    %p134 = por %p132, %p133
    %s136 = sadd.s32 %s135, 1
    %p139 = scmp.eq.s32.totalorder %s12, 1
    %p140 = scmp.ne.s32.totalorder %s135, %s137
    %p141 = scmp.eq.s32.totalorder %s12, 0
    %p142 = por %p140, %p141
    %p143 = scmp.ne.s32.totalorder %s135, %s137
    %p144 = scmp.eq.s32.totalorder %s17, 1
    %p145 = por %p143, %p144
    %p146 = scmp.ne.s32.totalorder %s137, %s138
    %p147 = scmp.eq.s32.totalorder %s17, 0
    %p148 = por %p146, %p147
    %p149 = scmp.ne.s32.totalorder %s137, %s138
    %p150 = scmp.eq.s32.totalorder %s18, 1
    %p151 = por %p149, %p150
    %p153 = scmp.ne.s32.totalorder %s138, %s152
    %p154 = scmp.eq.s32.totalorder %s18, 0
    %p155 = por %p153, %p154
    %s156 = ssub.s32 %s12, %s19
    %p157 = scmp.eq.s32.totalorder %s156, 0
    %s159 = sadd.s32 %s158, 1
    %s160 = scalar_select %p157, %s158, %s159
    %p163 = pneg %p157
    %p164 = scmp.eq.s32.totalorder %s12, 1
    %p165 = por %p163, %p164
    %p166 = scmp.ne.s32.totalorder %s158, %s161
    %p167 = scmp.eq.s32.totalorder %s12, 0
    %p168 = por %p166, %p167
    %p169 = scmp.ne.s32.totalorder %s158, %s161
    %p170 = scmp.eq.s32.totalorder %s17, 1
    %p171 = por %p169, %p170
    %p172 = scmp.ne.s32.totalorder %s161, %s162
    %p173 = scmp.eq.s32.totalorder %s17, 0
    %p174 = por %p172, %p173
    %p175 = scmp.ne.s32.totalorder %s161, %s162
    %p176 = scmp.eq.s32.totalorder %s18, 1
    %p177 = por %p175, %p176
    %p179 = scmp.ne.s32.totalorder %s162, %s178
    %p180 = scmp.eq.s32.totalorder %s18, 0
    %p181 = por %p179, %p180
    %p182 = scmp.le.s32.totalorder 1, %s12
    %p183 = scmp.lt.s32.totalorder %s12, 3
    %p184 = pnand %p182, %p183
    %p185 = pneg %p184
    // Predicated region
    $region9: #{model_forward.1} parent=5 // pred_check
      _
    $region10: #{model_forward.1} parent=5 // pred_check_branch
      %187 = sbr.rel (%p184) target = $region12
    $region11: #{model_forward.1} parent=5 // pred_region
      %s188 = ssub.s32 %s12, 1
      // Predicated region
      $region13: #{model_forward.1} parent=11 // pred_check
        %p189 = pneg %p85
      $region14: #{model_forward.1} parent=11 // pred_check_branch
        %191 = sbr.rel (%p189) target = $region16
      $region15: #{model_forward.1} parent=11 // pred_region
        _
      $region16: #{model_forward.1} parent=11 // pred_fallthru
        _
      // Predicated region
      $region17: #{model_forward.1} parent=11 // pred_check
        %p192 = pneg %p106
      $region18: #{model_forward.1} parent=11 // pred_check_branch
        %194 = sbr.rel (%p192) target = $region20
      $region19: #{model_forward.1} parent=11 // pred_region
        _
      $region20: #{model_forward.1} parent=11 // pred_fallthru
        _
      // Predicated region
      $region21: #{model_forward.1} parent=11 // pred_check
        %p195 = pneg %p127
      $region22: #{model_forward.1} parent=11 // pred_check_branch
        %197 = sbr.rel (%p195) target = $region24
      $region23: #{model_forward.1} parent=11 // pred_region
        _
      $region24: #{model_forward.1} parent=11 // pred_fallthru
        _
      // Predicated region
      $region25: #{model_forward.1} parent=11 // pred_check
        %p198 = pneg %p148
      $region26: #{model_forward.1} parent=11 // pred_check_branch
        %200 = sbr.rel (%p198) target = $region28
      $region27: #{model_forward.1} parent=11 // pred_region
        _
      $region28: #{model_forward.1} parent=11 // pred_fallthru
        _
    $region12: #{model_forward.1} parent=5 // pred_fallthru
      _
    %p201 = scmp.lt.s32.totalorder %s12, 2
    // Predicated region
    $region29: #{model_forward.1} parent=5 // pred_check
      %p202 = pneg %p201
    $region30: #{model_forward.1} parent=5 // pred_check_branch
      %204 = sbr.rel (%p202) target = $region32
    $region31: #{model_forward.1} parent=5 // pred_region
      // Predicated region
      $region33: #{model_forward.1} parent=31 // pred_check
        %p205 = pneg %p32
      $region34: #{model_forward.1} parent=31 // pred_check_branch
        %207 = sbr.rel (%p205) target = $region36
      $region35: #{model_forward.1} parent=31 // pred_region
        %p208 = scmp.lt.s32.totalorder %s12, 1
        %s209 = scalar_select %p208, %s12, 1
        %s210 = smul.addr %s209, 2
        %s211 = smul.addr %s210, 8
        %s212 = scalar_lea.vmem %s0, %s211
      $region36: #{model_forward.1} parent=31 // pred_fallthru
        _
      // Predicated region
      $region37: #{model_forward.1} parent=31 // pred_check
        %p213 = pneg %p58
      $region38: #{model_forward.1} parent=31 // pred_check_branch
        %215 = sbr.rel (%p213) target = $region40
      $region39: #{model_forward.1} parent=31 // pred_region
        %p216 = scmp.lt.s32.totalorder %s12, 1
        %s217 = scalar_select %p216, %s12, 1
        %s218 = smul.addr %s217, 2
        %s219 = smul.addr %s218, 8
        %s220 = scalar_lea.vmem %s1, %s219
      $region40: #{model_forward.1} parent=31 // pred_fallthru
        _
    $region32: #{model_forward.1} parent=5 // pred_fallthru
      _
    %p221 = scmp.le.s32.totalorder 1, %s12
    %p222 = scmp.lt.s32.totalorder %s12, 3
    %p223 = pnand %p221, %p222
    %p224 = pneg %p223
    // Predicated region
    $region41: #{model_forward.1} parent=5 // pred_check
      _
    $region42: #{model_forward.1} parent=5 // pred_check_branch
      %226 = sbr.rel (%p223) target = $region44
    $region43: #{model_forward.1} parent=5 // pred_region
      %s227 = ssub.s32 %s12, 1
      %p228 = scmp.lt.s32.totalorder %s17, 1
      %s229 = scalar_select %p228, %s17, 1
      %s230 = smul.addr %s229, 2
      %s231 = smul.addr %s230, 8
      %s232 = scalar_lea.vmem %s0, %s231
      %p233 = pneg %p38
      %p234 = pneg %p35
      %p235 = scmp.lt.s32.totalorder %s17, 1
      %s236 = scalar_select %p235, %s17, 1
      %s237 = smul.addr %s236, 2
      %s238 = smul.addr %s237, 8
      %s239 = scalar_lea.vmem %s1, %s238
      %p240 = pneg %p64
      %p241 = pneg %p61
      %p242 = pneg %p85
      %p243 = pneg %p82
      %p244 = pneg %p106
      %p245 = pneg %p103
      %p246 = pneg %p127
      %p247 = pneg %p124
      %p248 = pneg %p148
      %p249 = pneg %p145
      %p250 = pneg %p174
      %p251 = pneg %p171
      %p252 = scmp.lt.s32.totalorder %s17, 1
      %s253 = scalar_select %p252, %s17, 1
      %s254 = smul.addr %s253, 2
      %s255 = smul.addr %s254, 8
      %s256 = scalar_lea.vmem %s6, %s255
      %p257 = scmp.lt.s32.totalorder %s17, 1
      %s258 = scalar_select %p257, %s17, 1
      %s259 = smul.addr %s258, 2
      %s260 = smul.addr %s259, 8
      %s261 = scalar_lea.vmem %s0, %s260
      %p262 = scmp.lt.s32.totalorder %s17, 1
      %s263 = scalar_select %p262, %s17, 1
      %s264 = smul.addr %s263, 2
      %s265 = smul.addr %s264, 8
      %s266 = scalar_lea.vmem %s1, %s265
      %p267 = scmp.lt.s32.totalorder %s17, 1
      %s268 = scalar_select %p267, %s17, 1
      %s269 = smul.addr %s268, 2
      %s270 = smul.addr %s269, 8
      %s271 = scalar_lea.vmem %s6, %s270
      %v272 = vld [vmem:[%s261] sm:$0xff]
      %v273 = vld [vmem:[%s261 + $0x8] sm:$0xff]
      %v274 = vld [vmem:[%s266] sm:$0xff]
      %v275 = vld [vmem:[%s266 + $0x8] sm:$0xff]
      %v276 = vld [vmem:[%s2] sm:$0xff]
      %v277 = vld [vmem:[%s3] sm:$0x1]
      %vm278 = vcmask 130048
      %v280 = vsel %vm278, %v272, 0
      %v283 = vsel %vm278, %v273, 0
      %285 = vmatprep.subr.mxu0 0.0
      %286 = vmatpush1.msra.mxu0 %v274
      %287 = vmatprep.subr.mxu0 0.0
      %288 = vmatpush1.msra.mxu0 %v275
      %289 = vmatprep.subr.mxu0 0.0
      %290 = vmatpush1.msra.mxu0 0.0
      %291 = vmatprep.subr.mxu0 0.0
      %292 = vmatpush1.msra.mxu0 0.0
      %293 = vmatprep.subr.mxu0 0.0
      %294 = vmatpush1.msra.mxu0 0.0
      %295 = vmatprep.subr.mxu0 0.0
      %296 = vmatpush1.msra.mxu0 0.0
      %297 = vmatprep.subr.mxu0 0.0
      %298 = vmatpush1.msra.mxu0 0.0
      %299 = vmatprep.subr.mxu0 0.0
      %300 = vmatpush1.msra.mxu0 0.0
      %301 = vmatprep.subr.mxu0 0.0
      %302 = vmatpush1.msra.mxu0 0.0
      %303 = vmatprep.subr.mxu0 0.0
      %304 = vmatpush1.msra.mxu0 0.0
      %305 = vmatprep.subr.mxu0 0.0
      %306 = vmatpush1.msra.mxu0 0.0
      %307 = vmatprep.subr.mxu0 0.0
      %308 = vmatpush1.msra.mxu0 0.0
      %309 = vmatprep.subr.mxu0 0.0
      %310 = vmatpush1.msra.mxu0 0.0
      %311 = vmatprep.subr.mxu0 0.0
      %312 = vmatpush1.msra.mxu0 0.0
      %313 = vmatprep.subr.mxu0 0.0
      %314 = vmatpush1.msra.mxu0 0.0
      %315 = vmatprep.subr.mxu0 0.0
      %316 = vmatpush1.msra.mxu0 0.0
      %317 = vmatprep.subr.mxu0 0.0
      %318 = vmatpush1.msra.mxu0 0.0
      %319 = vmatprep.subr.mxu0 0.0
      %320 = vmatpush1.msra.mxu0 0.0
      %321 = vmatprep.subr.mxu0 0.0
      %322 = vmatpush1.msra.mxu0 0.0
      %323 = vmatprep.subr.mxu0 0.0
      %324 = vmatpush1.msra.mxu0 0.0
      %325 = vmatprep.subr.mxu0 0.0
      %326 = vmatpush1.msra.mxu0 0.0
      %327 = vmatprep.subr.mxu0 0.0
      %328 = vmatpush1.msra.mxu0 0.0
      %329 = vmatprep.subr.mxu0 0.0
      %330 = vmatpush1.msra.mxu0 0.0
      %331 = vmatprep.subr.mxu0 0.0
      %332 = vmatpush1.msra.mxu0 0.0
      %333 = vmatprep.subr.mxu0 0.0
      %334 = vmatpush1.msra.mxu0 0.0
      %335 = vmatprep.subr.mxu0 0.0
      %336 = vmatpush1.msra.mxu0 0.0
      %337 = vmatprep.subr.mxu0 0.0
      %338 = vmatpush1.msra.mxu0 0.0
      %339 = vmatprep.subr.mxu0 0.0
      %340 = vmatpush1.msra.mxu0 0.0
      %341 = vmatprep.subr.mxu0 0.0
      %342 = vmatpush1.msra.mxu0 0.0
      %343 = vmatprep.subr.mxu0 0.0
      %344 = vmatpush1.msra.mxu0 0.0
      %345 = vmatprep.subr.mxu0 0.0
      %346 = vmatpush1.msra.mxu0 0.0
      %347 = vmatprep.subr.mxu0 0.0
      %348 = vmatpush1.msra.mxu0 0.0
      %349 = vmatprep.mubr.f32.mxu0 0.0
      %350 = vmatmul.mubr.f32.gmra.mrb[0].mxu0 %v280
      %v351 = vpop.f32.mrb[0].mxu0
      %v352 = vadd.f32 0.0, %v351
      %v353 = vpop.f32.mrb[0].mxu0
      %354 = vmatprep.mubr.f32.mxu0 0.0
      %355 = vmatmul.mubr.f32.gmra.mrb[0].mxu0 %v283
      %v356 = vpop.f32.mrb[0].mxu0
      %v357 = vadd.f32 0.0, %v356
      %v358 = vpop.f32.mrb[0].mxu0
      %359 = vdwg.mxu0
      %v361 = vlaneseq
      %v362 = vshrl.u32 %v361, 7
      %v363 = vsub.s32 0, %v362
      %v364 = vrot.slane %v277, %v363
      %vm366 = vcmask 64512
      %v368 = vsel %vm366, %v352, 0
      %v371 = vsel %vm366, %v357, 0
      %373 = vmatprep.subr.mxu0 0.0
      %374 = vmatpush1.msra.mxu0 %v276
      %375 = vmatprep.subr.mxu0 0.0
      %376 = vmatpush1.msra.mxu0 0.0
      %377 = vmatprep.subr.mxu0 0.0
      %378 = vmatpush1.msra.mxu0 0.0
      %379 = vmatprep.subr.mxu0 0.0
      %380 = vmatpush1.msra.mxu0 0.0
      %381 = vmatprep.subr.mxu0 0.0
      %382 = vmatpush1.msra.mxu0 0.0
      %383 = vmatprep.subr.mxu0 0.0
      %384 = vmatpush1.msra.mxu0 0.0
      %385 = vmatprep.subr.mxu0 0.0
      %386 = vmatpush1.msra.mxu0 0.0
      %387 = vmatprep.subr.mxu0 0.0
      %388 = vmatpush1.msra.mxu0 0.0
      %389 = vmatprep.subr.mxu0 0.0
      %390 = vmatpush1.msra.mxu0 0.0
      %391 = vmatprep.subr.mxu0 0.0
      %392 = vmatpush1.msra.mxu0 0.0
      %393 = vmatprep.subr.mxu0 0.0
      %394 = vmatpush1.msra.mxu0 0.0
      %395 = vmatprep.subr.mxu0 0.0
      %396 = vmatpush1.msra.mxu0 0.0
      %397 = vmatprep.subr.mxu0 0.0
      %398 = vmatpush1.msra.mxu0 0.0
      %399 = vmatprep.subr.mxu0 0.0
      %400 = vmatpush1.msra.mxu0 0.0
      %401 = vmatprep.subr.mxu0 0.0
      %402 = vmatpush1.msra.mxu0 0.0
      %403 = vmatprep.subr.mxu0 0.0
      %404 = vmatpush1.msra.mxu0 0.0
      %405 = vmatprep.subr.mxu0 0.0
      %406 = vmatpush1.msra.mxu0 0.0
      %407 = vmatprep.subr.mxu0 0.0
      %408 = vmatpush1.msra.mxu0 0.0
      %409 = vmatprep.subr.mxu0 0.0
      %410 = vmatpush1.msra.mxu0 0.0
      %411 = vmatprep.subr.mxu0 0.0
      %412 = vmatpush1.msra.mxu0 0.0
      %413 = vmatprep.subr.mxu0 0.0
      %414 = vmatpush1.msra.mxu0 0.0
      %415 = vmatprep.subr.mxu0 0.0
      %416 = vmatpush1.msra.mxu0 0.0
      %417 = vmatprep.subr.mxu0 0.0
      %418 = vmatpush1.msra.mxu0 0.0
      %419 = vmatprep.subr.mxu0 0.0
      %420 = vmatpush1.msra.mxu0 0.0
      %421 = vmatprep.subr.mxu0 0.0
      %422 = vmatpush1.msra.mxu0 0.0
      %423 = vmatprep.subr.mxu0 0.0
      %424 = vmatpush1.msra.mxu0 0.0
      %425 = vmatprep.subr.mxu0 0.0
      %426 = vmatpush1.msra.mxu0 0.0
      %427 = vmatprep.subr.mxu0 0.0
      %428 = vmatpush1.msra.mxu0 0.0
      %429 = vmatprep.subr.mxu0 0.0
      %430 = vmatpush1.msra.mxu0 0.0
      %431 = vmatprep.subr.mxu0 0.0
      %432 = vmatpush1.msra.mxu0 0.0
      %433 = vmatprep.subr.mxu0 0.0
      %434 = vmatpush1.msra.mxu0 0.0
      %435 = vmatprep.subr.mxu0 0.0
      %436 = vmatpush1.msra.mxu0 0.0
      %437 = vmatprep.mubr.f32.mxu0 0.0
      %438 = vmatmul.mubr.f32.gmra.mrb[0].mxu0 %v368
      %v439 = vpop.f32.mrb[0].mxu0
      %v440 = vadd.f32 %v364, %v439
      %v441 = vpop.f32.mrb[0].mxu0
      %442 = vmatprep.mubr.f32.mxu0 0.0
      %443 = vmatmul.mubr.f32.gmra.mrb[0].mxu0 %v371
      %v444 = vpop.f32.mrb[0].mxu0
      %v445 = vadd.f32 %v364, %v444
      %v446 = vpop.f32.mrb[0].mxu0
      %447 = vdwg.mxu0
      %v448 = vmax.f32 %v440, 0.0
      %v449 = vmax.f32 %v445, 0.0
      %v450 = vld [vmem:[%s4] sm:$0xff]
      %v451 = vld [vmem:[%s4 + $0x8] sm:$0xff]
      %v452 = vld [vmem:[%s4 + $0x10] sm:$0xff]
      %v453 = vld [vmem:[%s4 + $0x18] sm:$0xff]
      %v454 = vld [vmem:[%s5] sm:$0x1]
      %vm455 = vcmask 261120
      %v457 = vsel %vm455, %v448, 0
      %v460 = vsel %vm455, %v449, 0
      %462 = vmatprep.subr.mxu0 0.0
      %463 = vmatpush1.msra.mxu0 %v450
      %464 = vmatprep.subr.mxu0 0.0
      %465 = vmatpush1.msra.mxu0 %v451
      %466 = vmatprep.subr.mxu0 0.0
      %467 = vmatpush1.msra.mxu0 %v452
      %468 = vmatprep.subr.mxu0 0.0
      %469 = vmatpush1.msra.mxu0 %v453
      %470 = vmatprep.subr.mxu0 0.0
      %471 = vmatpush1.msra.mxu0 0.0
      %472 = vmatprep.subr.mxu0 0.0
      %473 = vmatpush1.msra.mxu0 0.0
      %474 = vmatprep.subr.mxu0 0.0
      %475 = vmatpush1.msra.mxu0 0.0
      %476 = vmatprep.subr.mxu0 0.0
      %477 = vmatpush1.msra.mxu0 0.0
      %478 = vmatprep.subr.mxu0 0.0
      %479 = vmatpush1.msra.mxu0 0.0
      %480 = vmatprep.subr.mxu0 0.0
      %481 = vmatpush1.msra.mxu0 0.0
      %482 = vmatprep.subr.mxu0 0.0
      %483 = vmatpush1.msra.mxu0 0.0
      %484 = vmatprep.subr.mxu0 0.0
      %485 = vmatpush1.msra.mxu0 0.0
      %486 = vmatprep.subr.mxu0 0.0
      %487 = vmatpush1.msra.mxu0 0.0
      %488 = vmatprep.subr.mxu0 0.0
      %489 = vmatpush1.msra.mxu0 0.0
      %490 = vmatprep.subr.mxu0 0.0
      %491 = vmatpush1.msra.mxu0 0.0
      %492 = vmatprep.subr.mxu0 0.0
      %493 = vmatpush1.msra.mxu0 0.0
      %494 = vmatprep.subr.mxu0 0.0
      %495 = vmatpush1.msra.mxu0 0.0
      %496 = vmatprep.subr.mxu0 0.0
      %497 = vmatpush1.msra.mxu0 0.0
      %498 = vmatprep.subr.mxu0 0.0
      %499 = vmatpush1.msra.mxu0 0.0
      %500 = vmatprep.subr.mxu0 0.0
      %501 = vmatpush1.msra.mxu0 0.0
      %502 = vmatprep.subr.mxu0 0.0
      %503 = vmatpush1.msra.mxu0 0.0
      %504 = vmatprep.subr.mxu0 0.0
      %505 = vmatpush1.msra.mxu0 0.0
      %506 = vmatprep.subr.mxu0 0.0
      %507 = vmatpush1.msra.mxu0 0.0
      %508 = vmatprep.subr.mxu0 0.0
      %509 = vmatpush1.msra.mxu0 0.0
      %510 = vmatprep.subr.mxu0 0.0
      %511 = vmatpush1.msra.mxu0 0.0
      %512 = vmatprep.subr.mxu0 0.0
      %513 = vmatpush1.msra.mxu0 0.0
      %514 = vmatprep.subr.mxu0 0.0
      %515 = vmatpush1.msra.mxu0 0.0
      %516 = vmatprep.subr.mxu0 0.0
      %517 = vmatpush1.msra.mxu0 0.0
      %518 = vmatprep.subr.mxu0 0.0
      %519 = vmatpush1.msra.mxu0 0.0
      %520 = vmatprep.subr.mxu0 0.0
      %521 = vmatpush1.msra.mxu0 0.0
      %522 = vmatprep.subr.mxu0 0.0
      %523 = vmatpush1.msra.mxu0 0.0
      %524 = vmatprep.subr.mxu0 0.0
      %525 = vmatpush1.msra.mxu0 0.0
      %526 = vmatprep.mubr.f32.mxu0 0.0
      %527 = vmatmul.mubr.f32.gmra.mrb[0].mxu0 %v457
      %v528 = vpop.f32.mrb[0].mxu0
      %v529 = vadd.f32 0.0, %v528
      %v530 = vpop.f32.mrb[0].mxu0
      %531 = vmatprep.mubr.f32.mxu0 0.0
      %532 = vmatmul.mubr.f32.gmra.mrb[0].mxu0 %v460
      %v533 = vpop.f32.mrb[0].mxu0
      %v534 = vadd.f32 0.0, %v533
      %v535 = vpop.f32.mrb[0].mxu0
      %536 = vdwg.mxu0
      %v538 = vlaneseq
      %v539 = vshrl.u32 %v538, 7
      %v540 = vsub.s32 0, %v539
      %v541 = vrot.slane %v454, %v540
      %543 = vmatprep.subr.mxu0 0.0
      %544 = vmatpush1.msra.mxu0 %v529
      %545 = vmatprep.subr.mxu0 0.0
      %546 = vmatpush1.msra.mxu0 %v534
      %547 = vmatprep.subr.mxu0 0.0
      %548 = vmatpush1.msra.mxu0 0.0
      %549 = vmatprep.subr.mxu0 0.0
      %550 = vmatpush1.msra.mxu0 0.0
      %551 = vmatprep.subr.mxu0 0.0
      %552 = vmatpush1.msra.mxu0 0.0
      %553 = vmatprep.subr.mxu0 0.0
      %554 = vmatpush1.msra.mxu0 0.0
      %555 = vmatprep.subr.mxu0 0.0
      %556 = vmatpush1.msra.mxu0 0.0
      %557 = vmatprep.subr.mxu0 0.0
      %558 = vmatpush1.msra.mxu0 0.0
      %559 = vmatprep.subr.mxu0 0.0
      %560 = vmatpush1.msra.mxu0 0.0
      %561 = vmatprep.subr.mxu0 0.0
      %562 = vmatpush1.msra.mxu0 0.0
      %563 = vmatprep.subr.mxu0 0.0
      %564 = vmatpush1.msra.mxu0 0.0
      %565 = vmatprep.subr.mxu0 0.0
      %566 = vmatpush1.msra.mxu0 0.0
      %567 = vmatprep.subr.mxu0 0.0
      %568 = vmatpush1.msra.mxu0 0.0
      %569 = vmatprep.subr.mxu0 0.0
      %570 = vmatpush1.msra.mxu0 0.0
      %571 = vmatprep.subr.mxu0 0.0
      %572 = vmatpush1.msra.mxu0 0.0
      %573 = vmatprep.subr.mxu0 0.0
      %574 = vmatpush1.msra.mxu0 0.0
      %575 = vmatprep.subr.mxu0 0.0
      %576 = vmatpush1.msra.mxu0 0.0
      %577 = vmatprep.subr.mxu0 0.0
      %578 = vmatpush1.msra.mxu0 0.0
      %579 = vmatprep.subr.mxu0 0.0
      %580 = vmatpush1.msra.mxu0 0.0
      %581 = vmatprep.subr.mxu0 0.0
      %582 = vmatpush1.msra.mxu0 0.0
      %583 = vmatprep.subr.mxu0 0.0
      %584 = vmatpush1.msra.mxu0 0.0
      %585 = vmatprep.subr.mxu0 0.0
      %586 = vmatpush1.msra.mxu0 0.0
      %587 = vmatprep.subr.mxu0 0.0
      %588 = vmatpush1.msra.mxu0 0.0
      %589 = vmatprep.subr.mxu0 0.0
      %590 = vmatpush1.msra.mxu0 0.0
      %591 = vmatprep.subr.mxu0 0.0
      %592 = vmatpush1.msra.mxu0 0.0
      %593 = vmatprep.subr.mxu0 0.0
      %594 = vmatpush1.msra.mxu0 0.0
      %595 = vmatprep.subr.mxu0 0.0
      %596 = vmatpush1.msra.mxu0 0.0
      %597 = vmatprep.subr.mxu0 0.0
      %598 = vmatpush1.msra.mxu0 0.0
      %599 = vmatprep.subr.mxu0 0.0
      %600 = vmatpush1.msra.mxu0 0.0
      %601 = vmatprep.subr.mxu0 0.0
      %602 = vmatpush1.msra.mxu0 0.0
      %603 = vmatprep.subr.mxu0 0.0
      %604 = vmatpush1.msra.mxu0 0.0
      %605 = vmatprep.subr.mxu0 0.0
      %606 = vmatpush1.msra.mxu0 0.0
      %607 = vmatprep.mubr.f32.mxu0 0.0
      %608 = vmatmul.mubr.f32.gmra.mrb[0].mxu0 %v280
      %v609 = vpop.f32.mrb[0].mxu0
      %v610 = vadd.f32 %v541, %v609
      %v611 = vpop.f32.mrb[0].mxu0
      %612 = vmatprep.mubr.f32.mxu0 0.0
      %613 = vmatmul.mubr.f32.gmra.mrb[0].mxu0 %v283
      %v614 = vpop.f32.mrb[0].mxu0
      %v615 = vadd.f32 %v541, %v614
      %v616 = vpop.f32.mrb[0].mxu0
      %617 = vdwg.mxu0
      %618 = vst.msk [vmem:[%s271] sm:$0xff] %vm278, %v610
      %619 = vst.msk [vmem:[%s271 + $0x8] sm:$0xff] %vm278, %v615
      %p620 = scmp.lt.s32.totalorder %s17, 1
      %s621 = scalar_select %p620, %s17, 1
      %s622 = smul.addr %s621, 2
      %s623 = smul.addr %s622, 8
      %s624 = scalar_lea.vmem %s6, %s623
      // Predicated region
      $region45: #{model_forward.1} parent=43 // pred_check
        %p625 = pneg %p171
      $region46: #{model_forward.1} parent=43 // pred_check_branch
        %627 = sbr.rel (%p625) target = $region48
      $region47: #{model_forward.1} parent=43 // pred_region
        _
      $region48: #{model_forward.1} parent=43 // pred_fallthru
        _
    $region44: #{model_forward.1} parent=5 // pred_fallthru
      _
    %p628 = scmp.le.s32.totalorder 2, %s12
    // Predicated region
    $region49: #{model_forward.1} parent=5 // pred_check
      %p629 = pneg %p628
    $region50: #{model_forward.1} parent=5 // pred_check_branch
      %631 = sbr.rel (%p629) target = $region52
    $region51: #{model_forward.1} parent=5 // pred_region
      %s632 = ssub.s32 %s12, 2
      // Predicated region
      $region53: #{model_forward.1} parent=51 // pred_check
        %p633 = pneg %p177
      $region54: #{model_forward.1} parent=51 // pred_check_branch
        %635 = sbr.rel (%p633) target = $region56
      $region55: #{model_forward.1} parent=51 // pred_region
        %p636 = scmp.lt.s32.totalorder %s18, 1
        %s637 = scalar_select %p636, %s18, 1
        %s638 = smul.addr %s637, 2
        %s639 = smul.addr %s638, 8
        %s640 = scalar_lea.vmem %s6, %s639
      $region56: #{model_forward.1} parent=51 // pred_fallthru
        _
    $region52: #{model_forward.1} parent=5 // pred_fallthru
      _
  $region6: #{model_forward.1} parent=0 // loop_footer
    %s16 = sadd.s32 1, %s12
  $region7: #{model_forward.1} parent=0 // loop_footer_branch
    %11 = sbr.rel target = $region3
  $region8: #{model_forward.1} parent=0 // loop_exit
    _

</llo_original>
